<compile_context>
chip_gen: v5e
topology: v5e:2x2
jax: 0.10.0
libtpu: 0.0.40
codegen_flags: <defaults>
</compile_context>

<pallas_src>
import numpy as np
import jax
import jax.numpy as jnp
from jax.experimental import pallas as pl
from jax.experimental.pallas import tpu as pltpu


# ----------------------------- constants (host-side glue) ------------------------------

def _hz_to_mel_htk(f):
    return 2595.0 * np.log10(1.0 + np.asarray(f, dtype=np.float64) / 700.0)


def _mel_to_hz_htk(m):
    return 700.0 * (10.0 ** (np.asarray(m, dtype=np.float64) / 2595.0) - 1.0)


def melscale_fbanks(n_freqs, f_min, f_max, n_mels, sample_rate):
    """torchaudio.functional.melscale_fbanks with mel_scale='htk', norm=None."""
    all_freqs = np.linspace(0.0, sample_rate / 2.0, n_freqs)
    m_pts = np.linspace(_hz_to_mel_htk(f_min), _hz_to_mel_htk(f_max), n_mels + 2)
    f_pts = _mel_to_hz_htk(m_pts)
    f_diff = f_pts[1:] - f_pts[:-1]                       # (n_mels + 1,)
    slopes = f_pts[None, :] - all_freqs[:, None]          # (n_freqs, n_mels + 2)
    down = -slopes[:, :-2] / f_diff[:-1]
    up = slopes[:, 2:] / f_diff[1:]
    fb = np.maximum(0.0, np.minimum(down, up))
    return fb.astype(np.float32)                          # (n_freqs, n_mels)


def make_constants(sample_rate, n_fft, win_samples, n_mels):
    """Window-folded, lane-padded packed DFT basis + duplicated mel filterbank."""
    n_freqs = n_fft // 2 + 1
    half = ((n_freqs + 63) // 64) * 64                    # per-half pad so 2*half % 128 == 0

    # periodic Hann (torch.hann_window default), centered/padded to n_fft (torch.stft behavior)
    n = np.arange(win_samples)
    hann = 0.5 * (1.0 - np.cos(2.0 * np.pi * n / win_samples))
    lpad = (n_fft - win_samples) // 2
    window = np.zeros(n_fft, dtype=np.float64)
    window[lpad:lpad + win_samples] = hann

    nn = np.arange(n_fft)[:, None]
    kk = np.arange(n_freqs)[None, :]
    ang = 2.0 * np.pi * nn * kk / n_fft
    basis = np.zeros((n_fft, 2 * half), dtype=np.float32)                      # [cos | sin]
    basis[:, :n_freqs] = (window[:, None] * np.cos(ang)).astype(np.float32)
    basis[:, half:half + n_freqs] = (window[:, None] * np.sin(ang)).astype(np.float32)

    fb = melscale_fbanks(n_freqs, 0.0, sample_rate / 2.0, n_mels, sample_rate)  # (n_freqs, n_mels)
    fbT = np.zeros((n_mels, 2 * half), dtype=np.float32)
    fbT[:, :n_freqs] = fb.T                 # cos half
    fbT[:, half:half + n_freqs] = fb.T      # sin half -> (re^2 + im^2) @ fb in one matmul
    return jnp.asarray(basis), jnp.asarray(fbT)


def _round_up(a, m):
    return -(-a // m) * m


# --------------------------------- Pallas kernel + wrapper -----------------------------

def log_fbank_cal(x, *, sample_rate, n_fft, win_length, hop_length, n_mels):
    """x: (B, num_samples) float32 -> (B, n_mels, T) float32 (matches logFbankCal.forward)."""
    win_samples = int(win_length * sample_rate)   # int() truncation matches the torch module
    hop = int(hop_length * sample_rate)
    assert win_samples <= n_fft
    # TODO(synk): general hop (hop not dividing n_fft) needs a gather / manual-DMA framing path;
    # the gather-free chunk-shift decomposition below requires hop | n_fft.
    assert n_fft % hop == 0, "this kernel requires hop_length*sample_rate to divide n_fft"
    R = n_fft // hop

    basis, fbT = make_constants(sample_rate, n_fft, win_samples, n_mels)
    F2 = basis.shape[1]                           # 2 * lane-padded half width (multiple of 128)

    B, _ = x.shape
    pad = n_fft // 2
    xp = jnp.pad(x.astype(jnp.float32), ((0, 0), (pad, pad)), mode="reflect")  # center=True
    L = xp.shape[1]
    T = 1 + (L - n_fft) // hop                    # number of STFT frames

    # --- time tiling: VMEM use independent of utterance length, last tile zero-padded ---
    Tt = 256 if T > 256 else _round_up(T, 8)
    nT = -(-T // Tt)
    T_pad = nT * Tt
    C = T_pad + R - 1                             # hop-chunks so every in-kernel slice is in-bounds
    total = C * hop
    take = min(L, total)
    audio = jnp.pad(xp[:, :take], ((0, 0), (0, total - take)))
    chunks = audio.reshape(B, C, hop)             # pure reshape: no framed-tensor blowup in HBM

    inv_T = np.float32(1.0 / T)

    def kernel(chunks_ref, basis_ref, fbT_ref, out_ref, sum_ref):
        t = pl.program_id(1)
        t0 = t * Tt
        # Windowed one-sided DFT as R shifted hop-chunk matmuls (frames never materialized):
        # spec[tau, c] = sum_s chunks[t0+tau+s, :] @ basis[s*hop:(s+1)*hop, c]
        spec = jnp.dot(chunks_ref[0, pl.ds(t0, Tt), :], basis_ref[0:hop, :],
                       preferred_element_type=jnp.float32)              # (Tt, F2)
        for s in range(1, R):                                           # static unroll
            spec = spec + jnp.dot(chunks_ref[0, pl.ds(t0 + s, Tt), :],
                                  basis_ref[s * hop:(s + 1) * hop, :],
                                  preferred_element_type=jnp.float32)
        power = spec * spec                                             # packed re^2 / im^2
        # mel projection with time moved to lanes -> (n_mels, Tt), torch output orientation
        mel = jnp.dot(fbT_ref[...], power.T, preferred_element_type=jnp.float32)
        logmel = jnp.log(mel + 1e-6)
        out_ref[0] = logmel

        # masked per-utterance sum over time (frames >= T are padding); mean applied in XLA
        lane = jax.lax.broadcasted_iota(jnp.int32, (1, Tt), 1)
        valid = ((t0 + lane) < T).astype(jnp.float32)
        part = jnp.sum(logmel * valid, axis=1, keepdims=True)           # (n_mels, 1)

        @pl.when(t == 0)
        def _():
            sum_ref[...] = jnp.zeros_like(sum_ref)
        sum_ref[...] += part[None]

    logmel_full, sums = pl.pallas_call(
        kernel,
        out_shape=(jax.ShapeDtypeStruct((B, n_mels, T_pad), jnp.float32),
                   jax.ShapeDtypeStruct((B, n_mels, 1), jnp.float32)),
        grid=(B, nT),
        in_specs=[
            pl.BlockSpec((1, C, hop), lambda b, t: (b, 0, 0)),      # utterance chunks resident per b
            pl.BlockSpec((n_fft, F2), lambda b, t: (0, 0)),         # packed windowed DFT basis
            pl.BlockSpec((n_mels, F2), lambda b, t: (0, 0)),        # duplicated mel filterbank
        ],
        out_specs=(
            pl.BlockSpec((1, n_mels, Tt), lambda b, t: (b, 0, t)),  # time on lanes (torch layout)
            pl.BlockSpec((1, n_mels, 1), lambda b, t: (b, 0, 0)),   # per-b running sum (accumulator)
        ),
        compiler_params=pltpu.CompilerParams(
            dimension_semantics=("parallel", "arbitrary")),
    )(chunks, basis, fbT)

    # cheap XLA epilogue: subtract per-utterance time mean, drop padded frames
    return logmel_full[:, :, :T] - sums * inv_T


# ------------------------------------ driver ---------------------------------------

if __name__ == "__main__":
    # small, consistent config: 1600 Hz, 64-pt FFT, 20 ms window, 10 ms hop, 16 mels
    sample_rate = 1600
    n_fft = 64
    win_length = 0.02      # -> 32 samples
    hop_length = 0.01      # -> 16 samples
    n_mels = 16

    key = jax.random.PRNGKey(0)
    x = jax.random.normal(key, (2, 256), dtype=jnp.float32)    # (batch, num_samples)

    out = log_fbank_cal(x, sample_rate=sample_rate, n_fft=n_fft,
                        win_length=win_length, hop_length=hop_length, n_mels=n_mels)
    out = jax.block_until_ready(out)

    T = 1 + 256 // 16
    assert out.shape == (2, n_mels, T), out.shape                # (2, 16, 17)
    assert bool(jnp.all(jnp.isfinite(out)))
    # self-consistency: per-utterance mean over time was subtracted
    assert float(jnp.max(jnp.abs(jnp.mean(out, axis=2)))) < 1e-3
    print("KERNEL_OK")
</pallas_src>

<mosaic_0001>
module attributes {stable_mosaic.version = 11 : i64} {
  func.func @kernel(%arg0: i32, %arg1: i32, %arg2: memref<1x27x16xf32, #tpu.memory_space<vmem>>, %arg3: memref<64x128xf32, #tpu.memory_space<vmem>>, %arg4: memref<16x128xf32, #tpu.memory_space<vmem>>, %arg5: memref<1x16x24xf32, #tpu.memory_space<vmem>>, %arg6: memref<1x16x1xf32, #tpu.memory_space<vmem>>) attributes {dimension_semantics = [#tpu.dimension_semantics<parallel>, #tpu.dimension_semantics<arbitrary>], iteration_bounds = array<i64: 2, 1>, scalar_prefetch = 0 : i64, scratch_operands = 0 : i64, tpu.core_type = #tpu.core_type<tc>, window_params = [{transform_indices = @transform_0, window_bounds = array<i64: 1, 27, 16>}, {pipeline_mode = #tpu.pipeline_mode<synchronous>, transform_indices = @transform_1, window_bounds = array<i64: 64, 128>}, {pipeline_mode = #tpu.pipeline_mode<synchronous>, transform_indices = @transform_2, window_bounds = array<i64: 16, 128>}, {transform_indices = @transform_3, window_bounds = array<i64: 1, 16, 24>}, {transform_indices = @transform_4, window_bounds = array<i64: 1, 16, 1>}]} {
    %c24_i32 = arith.constant 24 : i32
    %0 = arith.muli %arg1, %c24_i32 : i32
    %c0 = arith.constant 0 : index
    %1 = arith.index_cast %0 : i32 to index
    %c0_0 = arith.constant 0 : index
    %2 = vector.load %arg2[%c0, %1, %c0_0] : memref<1x27x16xf32, #tpu.memory_space<vmem>>, vector<1x24x16xf32>
    %3 = vector.shape_cast %2 : vector<1x24x16xf32> to vector<24x16xf32>
    %c0_1 = arith.constant 0 : index
    %c0_2 = arith.constant 0 : index
    %4 = vector.load %arg3[%c0_1, %c0_2] : memref<64x128xf32, #tpu.memory_space<vmem>>, vector<16x128xf32>
    %cst = arith.constant dense<0.000000e+00> : vector<24x128xf32>
    %5 = tpu.matmul %3, %4, %cst {dimension_numbers = #tpu.dot_dimension_numbers<[1], [0], [0], [1], [0, 0, 1, 1], [], []>} : vector<24x16xf32>, vector<16x128xf32>, vector<24x128xf32> -> vector<24x128xf32>
    %c1_i32 = arith.constant 1 : i32
    %6 = arith.addi %0, %c1_i32 : i32
    %c0_3 = arith.constant 0 : index
    %7 = arith.index_cast %6 : i32 to index
    %c0_4 = arith.constant 0 : index
    %8 = vector.load %arg2[%c0_3, %7, %c0_4] : memref<1x27x16xf32, #tpu.memory_space<vmem>>, vector<1x24x16xf32>
    %9 = vector.shape_cast %8 : vector<1x24x16xf32> to vector<24x16xf32>
    %c16 = arith.constant 16 : index
    %c0_5 = arith.constant 0 : index
    %10 = vector.load %arg3[%c16, %c0_5] : memref<64x128xf32, #tpu.memory_space<vmem>>, vector<16x128xf32>
    %cst_6 = arith.constant dense<0.000000e+00> : vector<24x128xf32>
    %11 = tpu.matmul %9, %10, %cst_6 {dimension_numbers = #tpu.dot_dimension_numbers<[1], [0], [0], [1], [0, 0, 1, 1], [], []>} : vector<24x16xf32>, vector<16x128xf32>, vector<24x128xf32> -> vector<24x128xf32>
    %12 = arith.addf %5, %11 : vector<24x128xf32>
    %c2_i32 = arith.constant 2 : i32
    %13 = arith.addi %0, %c2_i32 : i32
    %c0_7 = arith.constant 0 : index
    %14 = arith.index_cast %13 : i32 to index
    %c0_8 = arith.constant 0 : index
    %15 = vector.load %arg2[%c0_7, %14, %c0_8] : memref<1x27x16xf32, #tpu.memory_space<vmem>>, vector<1x24x16xf32>
    %16 = vector.shape_cast %15 : vector<1x24x16xf32> to vector<24x16xf32>
    %c32 = arith.constant 32 : index
    %c0_9 = arith.constant 0 : index
    %17 = vector.load %arg3[%c32, %c0_9] : memref<64x128xf32, #tpu.memory_space<vmem>>, vector<16x128xf32>
    %cst_10 = arith.constant dense<0.000000e+00> : vector<24x128xf32>
    %18 = tpu.matmul %16, %17, %cst_10 {dimension_numbers = #tpu.dot_dimension_numbers<[1], [0], [0], [1], [0, 0, 1, 1], [], []>} : vector<24x16xf32>, vector<16x128xf32>, vector<24x128xf32> -> vector<24x128xf32>
    %19 = arith.addf %12, %18 : vector<24x128xf32>
    %c3_i32 = arith.constant 3 : i32
    %20 = arith.addi %0, %c3_i32 : i32
    %c0_11 = arith.constant 0 : index
    %21 = arith.index_cast %20 : i32 to index
    %c0_12 = arith.constant 0 : index
    %22 = vector.load %arg2[%c0_11, %21, %c0_12] : memref<1x27x16xf32, #tpu.memory_space<vmem>>, vector<1x24x16xf32>
    %23 = vector.shape_cast %22 : vector<1x24x16xf32> to vector<24x16xf32>
    %c48 = arith.constant 48 : index
    %c0_13 = arith.constant 0 : index
    %24 = vector.load %arg3[%c48, %c0_13] : memref<64x128xf32, #tpu.memory_space<vmem>>, vector<16x128xf32>
    %cst_14 = arith.constant dense<0.000000e+00> : vector<24x128xf32>
    %25 = tpu.matmul %23, %24, %cst_14 {dimension_numbers = #tpu.dot_dimension_numbers<[1], [0], [0], [1], [0, 0, 1, 1], [], []>} : vector<24x16xf32>, vector<16x128xf32>, vector<24x128xf32> -> vector<24x128xf32>
    %26 = arith.addf %19, %25 : vector<24x128xf32>
    %27 = arith.mulf %26, %26 : vector<24x128xf32>
    %c0_15 = arith.constant 0 : index
    %c0_16 = arith.constant 0 : index
    %28 = vector.load %arg4[%c0_15, %c0_16] : memref<16x128xf32, #tpu.memory_space<vmem>>, vector<16x128xf32>
    %29 = tpu.transpose %27, [1, 0] : vector<24x128xf32> -> vector<128x24xf32>
    %cst_17 = arith.constant dense<0.000000e+00> : vector<16x24xf32>
    %30 = tpu.matmul %28, %29, %cst_17 {dimension_numbers = #tpu.dot_dimension_numbers<[1], [0], [0], [1], [0, 0, 1, 1], [], []>} : vector<16x128xf32>, vector<128x24xf32>, vector<16x24xf32> -> vector<16x24xf32>
    %cst_18 = arith.constant 9.99999997E-7 : f32
    %31 = vector.broadcast %cst_18 : f32 to vector<16x24xf32>
    %32 = arith.addf %30, %31 : vector<16x24xf32>
    %33 = math.log %32 : vector<16x24xf32>
    %c0_19 = arith.constant 0 : index
    %c0_20 = arith.constant 0 : index
    %c0_21 = arith.constant 0 : index
    %34 = vector.load %arg5[%c0_19, %c0_20, %c0_21] : memref<1x16x24xf32, #tpu.memory_space<vmem>>, vector<1x16x24xf32>
    %35 = vector.shape_cast %34 : vector<1x16x24xf32> to vector<16x24xf32>
    %36 = vector.shape_cast %33 : vector<16x24xf32> to vector<1x16x24xf32>
    tpu.vector_store %arg5[%c0_19, %c0_20, %c0_21], %36 {strides = array<i32>} : memref<1x16x24xf32, #tpu.memory_space<vmem>>, vector<1x16x24xf32>,
    %37 = tpu.iota {dimensions = array<i32: 1>} : vector<1x24xi32>
    %38 = vector.broadcast %0 : i32 to vector<1x24xi32>
    %39 = arith.addi %38, %37 : vector<1x24xi32>
    %c17_i32 = arith.constant 17 : i32
    %40 = vector.broadcast %c17_i32 : i32 to vector<1x24xi32>
    %41 = arith.cmpi slt, %39, %40 : vector<1x24xi32>
    %42 = arith.extui %41 : vector<1x24xi1> to vector<1x24xi32>
    %43 = arith.sitofp %42 : vector<1x24xi32> to vector<1x24xf32>
    %44 = vector.broadcast %43 : vector<1x24xf32> to vector<16x24xf32>
    %45 = arith.mulf %33, %44 : vector<16x24xf32>
    %cst_22 = arith.constant dense<0.000000e+00> : vector<16xf32>
    %46 = vector.multi_reduction <add>, %45, %cst_22 [1] : vector<16x24xf32> to vector<16xf32>
    %47 = vector.shape_cast %46 : vector<16xf32> to vector<16x1xf32>
    %c0_i32 = arith.constant 0 : i32
    %48 = arith.cmpi eq, %arg1, %c0_i32 : i32
    %49 = arith.extui %48 : i1 to i32
    %c0_i32_23 = arith.constant 0 : i32
    %50 = arith.cmpi ne, %49, %c0_i32_23 : i32
    scf.if %50 {
      %cst_30 = arith.constant 0.000000e+00 : f32
      %55 = vector.broadcast %cst_30 : f32 to vector<1x16x1xf32>
      %c0_31 = arith.constant 0 : index
      %c0_32 = arith.constant 0 : index
      %c0_33 = arith.constant 0 : index
      %56 = vector.load %arg6[%c0_31, %c0_32, %c0_33] : memref<1x16x1xf32, #tpu.memory_space<vmem>>, vector<1x16x1xf32>
      tpu.vector_store %arg6[%c0_31, %c0_32, %c0_33], %55 {strides = array<i32>} : memref<1x16x1xf32, #tpu.memory_space<vmem>>, vector<1x16x1xf32>,
    } else {
    }
    %c0_24 = arith.constant 0 : index
    %c0_25 = arith.constant 0 : index
    %c0_26 = arith.constant 0 : index
    %51 = vector.load %arg6[%c0_24, %c0_25, %c0_26] : memref<1x16x1xf32, #tpu.memory_space<vmem>>, vector<1x16x1xf32>
    %52 = vector.shape_cast %47 : vector<16x1xf32> to vector<1x16x1xf32>
    %53 = arith.addf %51, %52 : vector<1x16x1xf32>
    %c0_27 = arith.constant 0 : index
    %c0_28 = arith.constant 0 : index
    %c0_29 = arith.constant 0 : index
    %54 = vector.load %arg6[%c0_27, %c0_28, %c0_29] : memref<1x16x1xf32, #tpu.memory_space<vmem>>, vector<1x16x1xf32>
    tpu.vector_store %arg6[%c0_27, %c0_28, %c0_29], %53 {strides = array<i32>} : memref<1x16x1xf32, #tpu.memory_space<vmem>>, vector<1x16x1xf32>,
    return
  }
  func.func @transform_0(%arg0: i32, %arg1: i32) -> (i32, i32, i32) {
    %c0_i32 = arith.constant 0 : i32
    %c0_i32_0 = arith.constant 0 : i32
    %c0_i32_1 = arith.constant 0 : i32
    return %arg0, %c0_i32, %c0_i32_0 : i32, i32, i32
  }
  func.func @transform_1(%arg0: i32, %arg1: i32) -> (i32, i32) {
    %c0_i32 = arith.constant 0 : i32
    %c0_i32_0 = arith.constant 0 : i32
    %c0_i32_1 = arith.constant 0 : i32
    return %c0_i32, %c0_i32_0 : i32, i32
  }
  func.func @transform_2(%arg0: i32, %arg1: i32) -> (i32, i32) {
    %c0_i32 = arith.constant 0 : i32
    %c0_i32_0 = arith.constant 0 : i32
    %c0_i32_1 = arith.constant 0 : i32
    return %c0_i32, %c0_i32_0 : i32, i32
  }
  func.func @transform_3(%arg0: i32, %arg1: i32) -> (i32, i32, i32) {
    %c0_i32 = arith.constant 0 : i32
    %c0_i32_0 = arith.constant 0 : i32
    return %arg0, %c0_i32, %arg1 : i32, i32, i32
  }
  func.func @transform_4(%arg0: i32, %arg1: i32) -> (i32, i32, i32) {
    %c0_i32 = arith.constant 0 : i32
    %c0_i32_0 = arith.constant 0 : i32
    %c0_i32_1 = arith.constant 0 : i32
    return %arg0, %c0_i32, %c0_i32_0 : i32, i32, i32
  }
}

</mosaic_0001>

<llo_original>
// kernel: tpu_custom_call.1
$region0: #{tpu_custom_call.1}
  #allocation0 [shape = 'u32[]', space=smem, size = 0x4, offset = 0x4, fixed_abs, tag = 'smem constant byte address 0x4 - core index']
  #allocation1 [shape = 'u32[72,128]{1,0:T(1,128)}', space=vmem, size = 0x9000, scoped, tag = 'internal scratch']
  %s0 = inlined_call_operand.vmem [shape: f32[2,27,16], index: 0, kind: input, shape index: {}]
  %s1 = inlined_call_operand.vmem [shape: f32[64,128], index: 1, kind: input, shape index: {}]
  %s2 = inlined_call_operand.vmem [shape: f32[16,128], index: 2, kind: input, shape index: {}]
  %s3 = inlined_call_operand.hbm [shape: f32[2,16,24], index: 3, kind: output, shape index: {0}]
  %s4 = inlined_call_operand.vmem [shape: f32[2,16,1], index: 4, kind: output, shape index: {1}]
  %5 = xla_tuple %s3, %s4
  %s6 = sld [smem:[#allocation0]]
  $region57: #{tpu_custom_call.1} parent=0
    _
  %s8 = ssub.s32 1, %s6
  %s9 = scalar_select 0, %s8, %s6
  $region1: #{tpu_custom_call.1} parent=0
    #allocation2 [shape = 'u8[16384]{0}', space=vmem, size = 0x4000, scoped, tag = 'output window, operand 0']
    #allocation3 [shape = 's32[2]{0}', space=sflag, size = 0x8, scoped, tag = 'scoped memory for tpu_custom_call.1']
    %10 = vsyncpa [#allocation3], 0
    %s11 = scalar_lea.sflag [#allocation3], 1
    %12 = vsyncpa %s11, 0
    loop: start=0, step=1, limit=4
    $region2: #{tpu_custom_call.1} parent=1 // loop_pre_header
      _
    $region3: #{tpu_custom_call.1} parent=1 // loop_header
      %s14 = sphi 0, %s18
      %p15 = scmp.ge.s32.totalorder %s14, 4
      %s21 = sphi 0, %s33
      %s22 = sphi 0, %s29
      %s23 = sphi 0, %s21
      %s24 = sphi 0, %s22
      %s25 = sphi 0, %s23
      %s26 = sphi 0, %s24
      %s36 = sphi 0, %s38
      %s39 = sphi 0, %s36
      %s40 = sphi 0, %s39
      %s56 = sphi 0, %s40
      %s60 = sphi 0, %s60
      %s62 = sphi 0, %s60
      %s63 = sphi 0, %s62
      %s77 = sphi 0, %s63
      %s81 = sphi 0, %s81
      %s83 = sphi 0, %s81
      %s84 = sphi 0, %s83
      %s98 = sphi 0, %s84
      %s106 = sphi 0, %s108
      %s109 = sphi 0, %s106
      %s110 = sphi 0, %s109
      %s126 = sphi 0, %s110
      %s132 = sphi 0, %s134
      %s135 = sphi 0, %s132
      %s136 = sphi 0, %s135
      %s152 = sphi 0, %s136
    $region4: #{tpu_custom_call.1} parent=1 // loop_header_branch
      %17 = sbr.rel (%p15) target = $region8
    $region5: #{tpu_custom_call.1} parent=1 // loop_body
      %s19 = ssub.s32 %s14, 1
      %s20 = ssub.s32 %s14, 2
      %s27 = sadd.s32 1, %s22
      %p28 = scmp.ge.s32.totalorder %s27, 1
      %s29 = scalar_select %p28, 0, %s27
      %s30 = sadd.s32 1, %s21
      %s31 = scalar_select %p28, %s30, %s21
      %p32 = scmp.ge.s32.totalorder %s31, 2
      %s33 = scalar_select %p32, 0, %s31
      %s34 = ssub.s32 %s21, %s33
      %p35 = scmp.eq.s32.totalorder %s34, 0
      %s37 = sadd.s32 %s36, 1
      %s38 = scalar_select %p35, %s36, %s37
      %p41 = pneg %p35
      %p42 = scmp.eq.s32.totalorder %s14, 1
      %p43 = por %p41, %p42
      %p44 = scmp.ne.s32.totalorder %s36, %s39
      %p45 = scmp.eq.s32.totalorder %s14, 0
      %p46 = por %p44, %p45
      %p47 = scmp.ne.s32.totalorder %s36, %s39
      %p48 = scmp.eq.s32.totalorder %s19, 1
      %p49 = por %p47, %p48
      %p50 = scmp.ne.s32.totalorder %s39, %s40
      %p51 = scmp.eq.s32.totalorder %s19, 0
      %p52 = por %p50, %p51
      %p53 = scmp.ne.s32.totalorder %s39, %s40
      %p54 = scmp.eq.s32.totalorder %s20, 1
      %p55 = por %p53, %p54
      %p57 = scmp.ne.s32.totalorder %s40, %s56
      %p58 = scmp.eq.s32.totalorder %s20, 0
      %p59 = por %p57, %p58
      %s61 = sadd.s32 %s60, 1
      %p64 = scmp.eq.s32.totalorder %s14, 1
      %p65 = scmp.ne.s32.totalorder %s60, %s62
      %p66 = scmp.eq.s32.totalorder %s14, 0
      %p67 = por %p65, %p66
      %p68 = scmp.ne.s32.totalorder %s60, %s62
      %p69 = scmp.eq.s32.totalorder %s19, 1
      %p70 = por %p68, %p69
      %p71 = scmp.ne.s32.totalorder %s62, %s63
      %p72 = scmp.eq.s32.totalorder %s19, 0
      %p73 = por %p71, %p72
      %p74 = scmp.ne.s32.totalorder %s62, %s63
      %p75 = scmp.eq.s32.totalorder %s20, 1
      %p76 = por %p74, %p75
      %p78 = scmp.ne.s32.totalorder %s63, %s77
      %p79 = scmp.eq.s32.totalorder %s20, 0
      %p80 = por %p78, %p79
      %s82 = sadd.s32 %s81, 1
      %p85 = scmp.eq.s32.totalorder %s14, 1
      %p86 = scmp.ne.s32.totalorder %s81, %s83
      %p87 = scmp.eq.s32.totalorder %s14, 0
      %p88 = por %p86, %p87
      %p89 = scmp.ne.s32.totalorder %s81, %s83
      %p90 = scmp.eq.s32.totalorder %s19, 1
      %p91 = por %p89, %p90
      %p92 = scmp.ne.s32.totalorder %s83, %s84
      %p93 = scmp.eq.s32.totalorder %s19, 0
      %p94 = por %p92, %p93
      %p95 = scmp.ne.s32.totalorder %s83, %s84
      %p96 = scmp.eq.s32.totalorder %s20, 1
      %p97 = por %p95, %p96
      %p99 = scmp.ne.s32.totalorder %s84, %s98
      %p100 = scmp.eq.s32.totalorder %s20, 0
      %p101 = por %p99, %p100
      %s102 = ssub.s32 %s21, %s33
      %s103 = ssub.s32 %s22, %s29
      %s104 = sor.u32 %s102, %s103
      %p105 = scmp.eq.s32.totalorder %s104, 0
      %s107 = sadd.s32 %s106, 1
      %s108 = scalar_select %p105, %s106, %s107
      %p111 = pneg %p105
      %p112 = scmp.eq.s32.totalorder %s14, 1
      %p113 = por %p111, %p112
      %p114 = scmp.ne.s32.totalorder %s106, %s109
      %p115 = scmp.eq.s32.totalorder %s14, 0
      %p116 = por %p114, %p115
      %p117 = scmp.ne.s32.totalorder %s106, %s109
      %p118 = scmp.eq.s32.totalorder %s19, 1
      %p119 = por %p117, %p118
      %p120 = scmp.ne.s32.totalorder %s109, %s110
      %p121 = scmp.eq.s32.totalorder %s19, 0
      %p122 = por %p120, %p121
      %p123 = scmp.ne.s32.totalorder %s109, %s110
      %p124 = scmp.eq.s32.totalorder %s20, 1
      %p125 = por %p123, %p124
      %p127 = scmp.ne.s32.totalorder %s110, %s126
      %p128 = scmp.eq.s32.totalorder %s20, 0
      %p129 = por %p127, %p128
      %s130 = ssub.s32 %s21, %s33
      %p131 = scmp.eq.s32.totalorder %s130, 0
      %s133 = sadd.s32 %s132, 1
      %s134 = scalar_select %p131, %s132, %s133
      %p137 = pneg %p131
      %p138 = scmp.eq.s32.totalorder %s14, 1
      %p139 = por %p137, %p138
      %p140 = scmp.ne.s32.totalorder %s132, %s135
      %p141 = scmp.eq.s32.totalorder %s14, 0
      %p142 = por %p140, %p141
      %p143 = scmp.ne.s32.totalorder %s132, %s135
      %p144 = scmp.eq.s32.totalorder %s19, 1
      %p145 = por %p143, %p144
      %p146 = scmp.ne.s32.totalorder %s135, %s136
      %p147 = scmp.eq.s32.totalorder %s19, 0
      %p148 = por %p146, %p147
      %p149 = scmp.ne.s32.totalorder %s135, %s136
      %p150 = scmp.eq.s32.totalorder %s20, 1
      %p151 = por %p149, %p150
      %p153 = scmp.ne.s32.totalorder %s136, %s152
      %p154 = scmp.eq.s32.totalorder %s20, 0
      %p155 = por %p153, %p154
      %p156 = scmp.le.s32.totalorder 1, %s14
      %p157 = scmp.lt.s32.totalorder %s14, 3
      %p158 = pnand %p156, %p157
      %p159 = pneg %p158
      // Predicated region
      $region9: #{tpu_custom_call.1} parent=5 // pred_check
        _
      $region10: #{tpu_custom_call.1} parent=5 // pred_check_branch
        %161 = sbr.rel (%p158) target = $region12
      $region11: #{tpu_custom_call.1} parent=5 // pred_region
        %s162 = ssub.s32 %s14, 1
        // Predicated region
        $region13: #{tpu_custom_call.1} parent=11 // pred_check
          %p163 = pneg %p73
        $region14: #{tpu_custom_call.1} parent=11 // pred_check_branch
          %165 = sbr.rel (%p163) target = $region16
        $region15: #{tpu_custom_call.1} parent=11 // pred_region
          _
        $region16: #{tpu_custom_call.1} parent=11 // pred_fallthru
          _
        // Predicated region
        $region17: #{tpu_custom_call.1} parent=11 // pred_check
          %p166 = pneg %p94
        $region18: #{tpu_custom_call.1} parent=11 // pred_check_branch
          %168 = sbr.rel (%p166) target = $region20
        $region19: #{tpu_custom_call.1} parent=11 // pred_region
          _
        $region20: #{tpu_custom_call.1} parent=11 // pred_fallthru
          _
      $region12: #{tpu_custom_call.1} parent=5 // pred_fallthru
        _
      %p169 = scmp.lt.s32.totalorder %s14, 2
      // Predicated region
      $region21: #{tpu_custom_call.1} parent=5 // pred_check
        %p170 = pneg %p169
      $region22: #{tpu_custom_call.1} parent=5 // pred_check_branch
        %172 = sbr.rel (%p170) target = $region24
      $region23: #{tpu_custom_call.1} parent=5 // pred_region
        // Predicated region
        $region25: #{tpu_custom_call.1} parent=23 // pred_check
          %p173 = pneg %p46
        $region26: #{tpu_custom_call.1} parent=23 // pred_check_branch
          %175 = sbr.rel (%p173) target = $region28
        $region27: #{tpu_custom_call.1} parent=23 // pred_region
          %p176 = scmp.lt.s32.totalorder %s21, 1
          %s177 = scalar_select %p176, %s21, 1
          %s178 = smul.addr %s177, 4
          %s179 = smul.addr %s178, 8
          %s180 = scalar_lea.vmem %s0, %s179
        $region28: #{tpu_custom_call.1} parent=23 // pred_fallthru
          _
      $region24: #{tpu_custom_call.1} parent=5 // pred_fallthru
        _
      %p181 = scmp.le.s32.totalorder 1, %s14
      %p182 = scmp.lt.s32.totalorder %s14, 3
      %p183 = pnand %p181, %p182
      %p184 = pneg %p183
      // Predicated region
      $region29: #{tpu_custom_call.1} parent=5 // pred_check
        _
      $region30: #{tpu_custom_call.1} parent=5 // pred_check_branch
        %186 = sbr.rel (%p183) target = $region32
      $region31: #{tpu_custom_call.1} parent=5 // pred_region
        %s187 = ssub.s32 %s14, 1
        %p188 = scmp.lt.s32.totalorder %s23, 1
        %s189 = scalar_select %p188, %s23, 1
        %s190 = smul.addr %s189, 4
        %s191 = smul.addr %s190, 8
        %s192 = scalar_lea.vmem %s0, %s191
        %p193 = pneg %p52
        %p194 = pneg %p49
        %p195 = pneg %p73
        %p196 = pneg %p70
        %p197 = pneg %p94
        %p198 = pneg %p91
        %p199 = pneg %p122
        %p200 = pneg %p119
        %s201 = sand.u32 %s109, 1
        %s202 = scalar_lea.sflag [#allocation3], %s201
        %s203 = sand.u32 %s109, 1
        %s204 = smul.addr %s203, 16
        %s205 = scalar_lea.vmem [#allocation2], %s204
        %p206 = pneg %p148
        %p207 = pneg %p145
        %p208 = scmp.lt.s32.totalorder %s23, 1
        %s209 = scalar_select %p208, %s23, 1
        %s210 = smul.addr %s209, 2
        %s211 = smul.addr %s210, 8
        %s212 = scalar_lea.vmem %s4, %s211
        %p213 = scmp.lt.s32.totalorder %s23, 1
        %s214 = scalar_select %p213, %s23, 1
        %s215 = smul.addr %s214, 4
        %s216 = smul.addr %s215, 8
        %s217 = scalar_lea.vmem %s0, %s216
        %p218 = scmp.lt.s32.totalorder %s23, 1
        %s219 = scalar_select %p218, %s23, 1
        %s220 = smul.addr %s219, 2
        %s221 = smul.addr %s220, 8
        %s222 = scalar_lea.vmem %s4, %s221
        %s223 = smul.u32 %s24, 24
        %s224 = scalar_lea.vmem %s217, %s223
        %v225 = vld [vmem:[%s224] sm:$0xff]
        %v226 = vld [vmem:[%s224 + $0x8] sm:$0xff]
        %v227 = vld [vmem:[%s224 + $0x10] sm:$0xff]
        %v228 = vld [vmem:[%s1] sm:$0xff]
        %v229 = vld [vmem:[%s1 + $0x8] sm:$0xff]
        %s230 = sadd.s32 %s223, 1
        %s231 = scalar_lea.vmem %s217, %s230
        %v232 = vld [vmem:[%s231] sm:$0xff]
        %v233 = vld [vmem:[%s231 + $0x8] sm:$0xff]
        %v234 = vld [vmem:[%s231 + $0x10] sm:$0xff]
        %v235 = vld [vmem:[%s1 + $0x10] sm:$0xff]
        %v236 = vld [vmem:[%s1 + $0x18] sm:$0xff]
        %vm237 = vcmask 130048
        %v239 = vsel %vm237, %v232, 0
        %v242 = vsel %vm237, %v233, 0
        %v245 = vsel %vm237, %v234, 0
        %247 = vmatpush.msra.mxu0 0.0
        %248 = vmatpush.msra.mxu0 0.0
        %249 = vmatpush.msra.mxu0 0.0
        %250 = vmatpush.msra.mxu0 0.0
        %251 = vmatpush.msra.mxu0 0.0
        %252 = vmatpush.msra.mxu0 0.0
        %253 = vmatpush.msra.mxu0 0.0
        %254 = vmatpush.msra.mxu0 0.0
        %255 = vmatpush.msra.mxu0 0.0
        %256 = vmatpush.msra.mxu0 0.0
        %257 = vmatpush.msra.mxu0 0.0
        %258 = vmatpush.msra.mxu0 0.0
        %259 = vmatpush.msra.mxu0 0.0
        %260 = vmatpush.msra.mxu0 0.0
        %261 = vmatpush.msra.mxu0 %v236
        %262 = vmatpush.msra.mxu0 %v235
        %263 = vmatmul.f32.gmra.mxu0 %v239
        %v264 = vpop.f32.mrf.mxu0
        %v265 = vadd.f32 0.0, %v264
        %266 = vmatmul.f32.gmra.mxu0 %v242
        %v267 = vpop.f32.mrf.mxu0
        %v268 = vadd.f32 0.0, %v267
        %269 = vmatmul.f32.gmra.mxu0 %v245
        %v270 = vpop.f32.mrf.mxu0
        %v271 = vadd.f32 0.0, %v270
        %272 = vdwg.mxu0
        %v274 = vsel %vm237, %v225, 0
        %v277 = vsel %vm237, %v226, 0
        %v280 = vsel %vm237, %v227, 0
        %282 = vmatpush.msra.mxu0 0.0
        %283 = vmatpush.msra.mxu0 0.0
        %284 = vmatpush.msra.mxu0 0.0
        %285 = vmatpush.msra.mxu0 0.0
        %286 = vmatpush.msra.mxu0 0.0
        %287 = vmatpush.msra.mxu0 0.0
        %288 = vmatpush.msra.mxu0 0.0
        %289 = vmatpush.msra.mxu0 0.0
        %290 = vmatpush.msra.mxu0 0.0
        %291 = vmatpush.msra.mxu0 0.0
        %292 = vmatpush.msra.mxu0 0.0
        %293 = vmatpush.msra.mxu0 0.0
        %294 = vmatpush.msra.mxu0 0.0
        %295 = vmatpush.msra.mxu0 0.0
        %296 = vmatpush.msra.mxu0 %v229
        %297 = vmatpush.msra.mxu0 %v228
        %298 = vmatmul.f32.gmra.mxu0 %v274
        %v299 = vpop.f32.mrf.mxu0
        %v300 = vadd.f32 %v265, %v299
        %301 = vmatmul.f32.gmra.mxu0 %v277
        %v302 = vpop.f32.mrf.mxu0
        %v303 = vadd.f32 %v268, %v302
        %304 = vmatmul.f32.gmra.mxu0 %v280
        %v305 = vpop.f32.mrf.mxu0
        %v306 = vadd.f32 %v271, %v305
        %307 = vdwg.mxu0
        %s308 = sadd.s32 %s223, 2
        %s309 = scalar_lea.vmem %s217, %s308
        %v310 = vld [vmem:[%s309] sm:$0xff]
        %v311 = vld [vmem:[%s309 + $0x8] sm:$0xff]
        %v312 = vld [vmem:[%s309 + $0x10] sm:$0xff]
        %v313 = vld [vmem:[%s1 + $0x20] sm:$0xff]
        %v314 = vld [vmem:[%s1 + $0x28] sm:$0xff]
        %v316 = vsel %vm237, %v310, 0
        %v319 = vsel %vm237, %v311, 0
        %v322 = vsel %vm237, %v312, 0
        %324 = vmatpush.msra.mxu0 0.0
        %325 = vmatpush.msra.mxu0 0.0
        %326 = vmatpush.msra.mxu0 0.0
        %327 = vmatpush.msra.mxu0 0.0
        %328 = vmatpush.msra.mxu0 0.0
        %329 = vmatpush.msra.mxu0 0.0
        %330 = vmatpush.msra.mxu0 0.0
        %331 = vmatpush.msra.mxu0 0.0
        %332 = vmatpush.msra.mxu0 0.0
        %333 = vmatpush.msra.mxu0 0.0
        %334 = vmatpush.msra.mxu0 0.0
        %335 = vmatpush.msra.mxu0 0.0
        %336 = vmatpush.msra.mxu0 0.0
        %337 = vmatpush.msra.mxu0 0.0
        %338 = vmatpush.msra.mxu0 %v314
        %339 = vmatpush.msra.mxu0 %v313
        %340 = vmatmul.f32.gmra.mxu0 %v316
        %v341 = vpop.f32.mrf.mxu0
        %v342 = vadd.f32 0.0, %v341
        %343 = vmatmul.f32.gmra.mxu0 %v319
        %v344 = vpop.f32.mrf.mxu0
        %v345 = vadd.f32 0.0, %v344
        %346 = vmatmul.f32.gmra.mxu0 %v322
        %v347 = vpop.f32.mrf.mxu0
        %v348 = vadd.f32 0.0, %v347
        %349 = vdwg.mxu0
        %v350 = vadd.f32 %v300, %v342
        %v351 = vadd.f32 %v303, %v345
        %v352 = vadd.f32 %v306, %v348
        %s353 = sadd.s32 %s223, 3
        %s354 = scalar_lea.vmem %s217, %s353
        %v355 = vld [vmem:[%s354] sm:$0xff]
        %v356 = vld [vmem:[%s354 + $0x8] sm:$0xff]
        %v357 = vld [vmem:[%s354 + $0x10] sm:$0xff]
        %v358 = vld [vmem:[%s1 + $0x30] sm:$0xff]
        %v359 = vld [vmem:[%s1 + $0x38] sm:$0xff]
        %v361 = vsel %vm237, %v355, 0
        %v364 = vsel %vm237, %v356, 0
        %v367 = vsel %vm237, %v357, 0
        %369 = vmatpush.msra.mxu0 0.0
        %370 = vmatpush.msra.mxu0 0.0
        %371 = vmatpush.msra.mxu0 0.0
        %372 = vmatpush.msra.mxu0 0.0
        %373 = vmatpush.msra.mxu0 0.0
        %374 = vmatpush.msra.mxu0 0.0
        %375 = vmatpush.msra.mxu0 0.0
        %376 = vmatpush.msra.mxu0 0.0
        %377 = vmatpush.msra.mxu0 0.0
        %378 = vmatpush.msra.mxu0 0.0
        %379 = vmatpush.msra.mxu0 0.0
        %380 = vmatpush.msra.mxu0 0.0
        %381 = vmatpush.msra.mxu0 0.0
        %382 = vmatpush.msra.mxu0 0.0
        %383 = vmatpush.msra.mxu0 %v359
        %384 = vmatpush.msra.mxu0 %v358
        %385 = vmatmul.f32.gmra.mxu0 %v361
        %v386 = vpop.f32.mrf.mxu0
        %v387 = vadd.f32 0.0, %v386
        %388 = vmatmul.f32.gmra.mxu0 %v364
        %v389 = vpop.f32.mrf.mxu0
        %v390 = vadd.f32 0.0, %v389
        %391 = vmatmul.f32.gmra.mxu0 %v367
        %v392 = vpop.f32.mrf.mxu0
        %v393 = vadd.f32 0.0, %v392
        %394 = vdwg.mxu0
        %v395 = vadd.f32 %v350, %v387
        %v396 = vadd.f32 %v351, %v390
        %v397 = vadd.f32 %v352, %v393
        %v398 = vmul.f32 %v395, %v395
        %v399 = vmul.f32 %v396, %v396
        %v400 = vmul.f32 %v397, %v397
        %v401 = vld [vmem:[%s2] sm:$0xff]
        %v402 = vld [vmem:[%s2 + $0x8] sm:$0xff]
        %403 = vmatpush.xpose.msra.mxu0 0.0
        %404 = vmatpush.xpose.msra.mxu0 0.0
        %405 = vmatpush.xpose.msra.mxu0 0.0
        %406 = vmatpush.xpose.msra.mxu0 0.0
        %407 = vmatpush.xpose.msra.mxu0 0.0
        %408 = vmatpush.xpose.msra.mxu0 0.0
        %409 = vmatpush.xpose.msra.mxu0 0.0
        %410 = vmatpush.xpose.msra.mxu0 0.0
        %411 = vmatpush.xpose.msra.mxu0 0.0
        %412 = vmatpush.xpose.msra.mxu0 0.0
        %413 = vmatpush.xpose.msra.mxu0 0.0
        %414 = vmatpush.xpose.msra.mxu0 0.0
        %415 = vmatpush.xpose.msra.mxu0 0.0
        %416 = vmatpush.xpose.msra.mxu0 %v400
        %417 = vmatpush.xpose.msra.mxu0 %v399
        %418 = vmatpush.xpose.msra.mxu0 %v398
        %419 = vmatmul.f32.gmra.mxu0 %v401
        %v420 = vpop.f32.mrf.mxu0
        %v421 = vadd.f32 1e-06, %v420
        %422 = vmatmul.f32.gmra.mxu0 %v402
        %v423 = vpop.f32.mrf.mxu0
        %v424 = vadd.f32 1e-06, %v423
        %425 = vdwg.mxu0
        %v426 = vlog2.pop %v421
        %v427 = vmul.f32 %v426, 0.6931472
        %v428 = vlog2.pop %v424
        %v429 = vmul.f32 %v428, 0.6931472
        %vm430 = vcmask 195584
        %431 = vst.msk [vmem:[%s205] sm:$0xff] %vm430, %v427
        %432 = vst.msk [vmem:[%s205 + $0x8] sm:$0xff] %vm430, %v429
        %v433 = vlaneseq
        %v434 = vand.u32 %v433, 127
        %v435 = vstv %s223
        %v436 = vadd.s32 %v435, %v434
        %vm437 = vcmp.lt.s32.totalorder %v436, 17
        %v438 = vsel %vm437, 1, 0
        %v439 = vcvt.s32.f32 %v438
        %v440 = vmul.f32 %v427, %v439
        %v441 = vmul.f32 %v429, %v439
        %v442 = vsel %vm430, %v440, 0.0
        %443 = vadd.xlane.f32.xlu0 %v442
        %v444 = vpop.xlane.xlu0 %443
        %v445 = vsel %vm430, %v441, 0.0
        %446 = vadd.xlane.f32.xlu0 %v445
        %v447 = vpop.xlane.xlu0 %446
        %p448 = scmp.eq.s32.totalorder %s24, 0
        // Predicated region
        $region33: #{tpu_custom_call.1} parent=31 // pred_check
          %p449 = pneg %p448
        $region34: #{tpu_custom_call.1} parent=31 // pred_check_branch
          %451 = sbr.rel (%p449) target = $region36
        $region35: #{tpu_custom_call.1} parent=31 // pred_region
          %vm452 = vcmask 7168
          %453 = vst.msk [vmem:[%s222] sm:$0xff] %vm452, 0.0
          %454 = vst.msk [vmem:[%s222 + $0x8] sm:$0xff] %vm452, 0.0
        $region36: #{tpu_custom_call.1} parent=31 // pred_fallthru
          _
        %v455 = vld [vmem:[%s222] sm:$0xff]
        %v456 = vld [vmem:[%s222 + $0x8] sm:$0xff]
        %v457 = vadd.f32 %v455, %v444
        %v458 = vadd.f32 %v456, %v447
        %vm459 = vcmask 7168
        %460 = vst.msk [vmem:[%s222] sm:$0xff] %vm459, %v457
        %461 = vst.msk [vmem:[%s222 + $0x8] sm:$0xff] %vm459, %v458
        %s462 = sand.u32 %s109, 1
        %s463 = scalar_lea.sflag [#allocation3], %s462
        %s464 = sand.u32 %s109, 1
        %s465 = smul.addr %s464, 16
        %s466 = scalar_lea.vmem [#allocation2], %s465
        %p467 = scmp.lt.s32.totalorder %s23, 1
        %s468 = scalar_select %p467, %s23, 1
        %s469 = smul.addr %s468, 2
        %s470 = smul.addr %s469, 8
        %s471 = scalar_lea.vmem %s4, %s470
        // Predicated region
        $region37: #{tpu_custom_call.1} parent=31 // pred_check
          %p472 = pneg %p119
        $region38: #{tpu_custom_call.1} parent=31 // pred_check_branch
          %474 = sbr.rel (%p472) target = $region40
        $region39: #{tpu_custom_call.1} parent=31 // pred_region
          %476 = vsyncadd %s463, 0
          %s477 = smul.addr %s23, 2
          %s478 = sadd.s32 %s24, %s477
          %s479 = smul.addr %s478, 8
          %s480 = scalar_lea.hbm %s3, %s479
          %s481 = sshll.u32 %s466, 4
          %s482 = int_to_ptr.vmem [resolvable:$true] %s481
          %s483 = sshll.u32 %s480, 4
          %s484 = int_to_ptr.hbm [resolvable:$true] %s483
          %489 = dma.vmem_to_hbm [thread:$0]  %s482, 256, %s484, %s463, 128, 128, 8
        $region40: #{tpu_custom_call.1} parent=31 // pred_fallthru
          _
        // Predicated region
        $region41: #{tpu_custom_call.1} parent=31 // pred_check
          %p490 = pneg %p145
        $region42: #{tpu_custom_call.1} parent=31 // pred_check_branch
          %492 = sbr.rel (%p490) target = $region44
        $region43: #{tpu_custom_call.1} parent=31 // pred_region
          _
        $region44: #{tpu_custom_call.1} parent=31 // pred_fallthru
          _
      $region32: #{tpu_custom_call.1} parent=5 // pred_fallthru
        _
      %p493 = scmp.le.s32.totalorder 2, %s14
      // Predicated region
      $region45: #{tpu_custom_call.1} parent=5 // pred_check
        %p494 = pneg %p493
      $region46: #{tpu_custom_call.1} parent=5 // pred_check_branch
        %496 = sbr.rel (%p494) target = $region48
      $region47: #{tpu_custom_call.1} parent=5 // pred_region
        %s497 = ssub.s32 %s14, 2
        // Predicated region
        $region49: #{tpu_custom_call.1} parent=47 // pred_check
          %p498 = pneg %p125
        $region50: #{tpu_custom_call.1} parent=47 // pred_check_branch
          %500 = sbr.rel (%p498) target = $region52
        $region51: #{tpu_custom_call.1} parent=47 // pred_region
          %s501 = sand.u32 %s110, 1
          %s502 = scalar_lea.sflag [#allocation3], %s501
          %s503 = sand.u32 %s110, 1
          %s504 = smul.addr %s503, 16
          %s505 = scalar_lea.vmem [#allocation2], %s504
          %507 = dma.done %s502, 256
        $region52: #{tpu_custom_call.1} parent=47 // pred_fallthru
          _
        // Predicated region
        $region53: #{tpu_custom_call.1} parent=47 // pred_check
          %p508 = pneg %p151
        $region54: #{tpu_custom_call.1} parent=47 // pred_check_branch
          %510 = sbr.rel (%p508) target = $region56
        $region55: #{tpu_custom_call.1} parent=47 // pred_region
          %p511 = scmp.lt.s32.totalorder %s25, 1
          %s512 = scalar_select %p511, %s25, 1
          %s513 = smul.addr %s512, 2
          %s514 = smul.addr %s513, 8
          %s515 = scalar_lea.vmem %s4, %s514
        $region56: #{tpu_custom_call.1} parent=47 // pred_fallthru
          _
      $region48: #{tpu_custom_call.1} parent=5 // pred_fallthru
        _
    $region6: #{tpu_custom_call.1} parent=1 // loop_footer
      %s18 = sadd.s32 1, %s14
    $region7: #{tpu_custom_call.1} parent=1 // loop_footer_branch
      %13 = sbr.rel target = $region3
    $region8: #{tpu_custom_call.1} parent=1 // loop_exit
      _
    %516 = vsyncpa [#allocation3], 1
    %s517 = scalar_lea.sflag [#allocation3], 1
    %518 = vsyncpa %s517, 1

</llo_original>
